<compile_context>
chip_gen: v7x
topology: tpu7x:2x2x1
jax: 0.10.0
libtpu: 0.0.40
codegen_flags: <defaults>
</compile_context>

<pallas_src>
import functools

import jax
import jax.numpy as jnp
import numpy as np
from jax.experimental import pallas as pl
from jax.experimental.pallas import tpu as pltpu

_LANE = 128
_SUBLANE = 8


def _round_up(n, m):
    return ((n + m - 1) // m) * m


def _cdiv(a, b):
    return -(-a // b)


def _pad2d(a, rows, cols):
    return jnp.pad(a, ((0, rows - a.shape[0]), (0, cols - a.shape[1])))


# ----------------------------------------------------------------------------
# Fused forward kernel
# ----------------------------------------------------------------------------
def _vae_fused_kernel(x_ref, eps_ref, *refs, num_layers, latent_p):
    """Whole VAE forward on one batch tile.

    refs = [w_enc0(bf16), b_enc0(f32), ..., w_mulv, b_mulv, w_dec0, b_dec0,
            ..., w_out, b_out, xrec_out_ref, mu_out_ref, logvar_out_ref]
    Weights are already [in_p, out_p] (pre-transposed + padded, bf16); biases
    are [1, out_p] f32.
    """
    n_params = 4 * num_layers + 4
    p = refs[:n_params]
    xrec_ref, mu_ref, logvar_ref = refs[n_params:]

    def linear(h_f32, w_ref, b_ref):
        # bf16 operands feed the MXU at native rate; accumulate in f32 and do
        # the bias add on the VPU in f32.
        return jnp.dot(h_f32.astype(jnp.bfloat16), w_ref[...],
                       preferred_element_type=jnp.float32) + b_ref[...]

    idx = 0
    h = x_ref[...].astype(jnp.float32)

    # --- encoder: [Linear, ReLU] * num_layers -------------------------------
    for _ in range(num_layers):
        h = jnp.maximum(linear(h, p[idx], p[idx + 1]), 0.0)
        idx += 2

    # --- fused mu / logvar head (single MXU op) ------------------------------
    mlv = linear(h, p[idx], p[idx + 1])          # [TB, 2*latent_p]
    idx += 2
    mu = mlv[:, :latent_p]
    logvar = mlv[:, latent_p:]

    # --- reparameterize: z = mu + eps * exp(0.5 * logvar) (EUP exp, f32) -----
    std = jnp.exp(0.5 * logvar)
    z = mu + eps_ref[...].astype(jnp.float32) * std

    # --- decoder: [Linear, ReLU] * num_layers + final Linear -----------------
    h = z
    for _ in range(num_layers):
        h = jnp.maximum(linear(h, p[idx], p[idx + 1]), 0.0)
        idx += 2
    x_recon = linear(h, p[idx], p[idx + 1])

    xrec_ref[...] = x_recon.astype(xrec_ref.dtype)
    mu_ref[...] = mu.astype(mu_ref.dtype)
    logvar_ref[...] = logvar.astype(logvar_ref.dtype)


# ----------------------------------------------------------------------------
# One-time parameter preparation (hoisted out of the per-call path)
# ----------------------------------------------------------------------------
def prepare_vae_params(params):
    """Transpose every weight to [in, out], zero-pad feature dims to lane
    multiples, cast weights to bf16 (MXU-native), keep biases f32, and pack
    fc_mu / fc_logvar into one [hid_p, 2*lat_p] head.  Do this ONCE."""
    f32, bf16 = jnp.float32, jnp.bfloat16
    num_layers = len(params["encoder"])
    input_dim = params["encoder"][0]["w"].shape[1]
    hidden_size = params["encoder"][0]["w"].shape[0]
    latent_dim = params["fc_mu"]["w"].shape[0]

    in_p = _round_up(input_dim, _LANE)
    hid_p = _round_up(hidden_size, _LANE)
    lat_p = _round_up(latent_dim, _LANE)

    def prep_linear(layer, in_pad, out_pad):
        w = _pad2d(layer["w"].T.astype(f32), in_pad, out_pad).astype(bf16)
        b = _pad2d(layer["b"].reshape(1, -1).astype(f32), 1, out_pad)
        return w, b

    arrays = []
    prev = in_p
    for layer in params["encoder"]:
        arrays += list(prep_linear(layer, prev, hid_p))
        prev = hid_p

    w_mu = _pad2d(params["fc_mu"]["w"].T.astype(f32), hid_p, lat_p)
    w_lv = _pad2d(params["fc_logvar"]["w"].T.astype(f32), hid_p, lat_p)
    b_mu = _pad2d(params["fc_mu"]["b"].reshape(1, -1).astype(f32), 1, lat_p)
    b_lv = _pad2d(params["fc_logvar"]["b"].reshape(1, -1).astype(f32), 1, lat_p)
    arrays += [jnp.concatenate([w_mu, w_lv], axis=1).astype(bf16),
               jnp.concatenate([b_mu, b_lv], axis=1)]

    prev = lat_p
    for layer in params["decoder"]:
        arrays += list(prep_linear(layer, prev, hid_p))
        prev = hid_p
    arrays += list(prep_linear(params["decoder_out"], prev, in_p))

    meta = dict(num_layers=num_layers, input_dim=input_dim,
                hidden_size=hidden_size, latent_dim=latent_dim,
                in_p=in_p, hid_p=hid_p, lat_p=lat_p)
    return tuple(arrays), meta


def _pick_batch_tile(batch):
    """Batch tile: >=2 grid steps when batch >= 16 (keeps both v7x TCs busy),
    padding waste bounded to ~one sublane's worth, fattest tile that fits."""
    b_al = _round_up(batch, _SUBLANE)
    if batch < 16:
        return b_al
    max_waste = 0.07 * batch + _SUBLANE
    for cand in (512, 256, 128, 64, 32, 16, 8):
        n_tiles = _cdiv(b_al, cand)
        if n_tiles < 2:
            continue
        if n_tiles * cand - batch <= max_waste:
            return cand
    return _SUBLANE


# ----------------------------------------------------------------------------
# Forward: pad inputs, build specs, single fused pallas_call
# ----------------------------------------------------------------------------
def vae_forward(prepped, x, eps):
    param_arrays, meta = prepped
    f32 = jnp.float32
    batch, input_dim = x.shape
    num_layers = meta["num_layers"]
    in_p, hid_p, lat_p = meta["in_p"], meta["hid_p"], meta["lat_p"]
    latent_dim = meta["latent_dim"]

    tb = _pick_batch_tile(batch)
    b_p = _cdiv(_round_up(batch, _SUBLANE), tb) * tb
    grid = (b_p // tb,)

    x_p = _pad2d(x.astype(f32), b_p, in_p)
    eps_p = _pad2d(eps.astype(f32), b_p, lat_p)

    act_spec = lambda cols: pl.BlockSpec((tb, cols), lambda i: (i, 0))

    def weight_spec(arr):
        # Grid-invariant block: single-buffer it (nothing to prefetch), which
        # halves the weight VMEM footprint (matters most on v7x's 64 MiB).
        try:
            return pl.BlockSpec(arr.shape, lambda i: (0, 0),
                                pipeline_mode=pl.Buffered(1))
        except TypeError:  # fall back cleanly if pipeline_mode is unavailable
            return pl.BlockSpec(arr.shape, lambda i: (0, 0))

    in_specs = [act_spec(in_p), act_spec(lat_p)]
    in_specs += [weight_spec(a) for a in param_arrays]
    out_specs = (act_spec(in_p), act_spec(lat_p), act_spec(lat_p))
    out_shape = (
        jax.ShapeDtypeStruct((b_p, in_p), f32),
        jax.ShapeDtypeStruct((b_p, lat_p), f32),
        jax.ShapeDtypeStruct((b_p, lat_p), f32),
    )

    # Explicit scoped-VMEM budget: weights (budgeted x2 for safety even though
    # single-buffered) + double-buffered activation tiles + f32 intermediates.
    param_bytes = sum(int(a.size) * a.dtype.itemsize for a in param_arrays)
    io_bytes = 4 * tb * (2 * in_p + 4 * lat_p)            # x, eps, 3 outputs
    interm_bytes = 6 * 4 * tb * max(in_p, hid_p, 2 * lat_p)
    vmem_limit = 2 * param_bytes + 2 * io_bytes + interm_bytes + (4 << 20)
    vmem_limit = int(max(32 << 20, min(vmem_limit, 64 << 20)))

    kernel = functools.partial(_vae_fused_kernel,
                               num_layers=num_layers, latent_p=lat_p)
    # TODO(synk): for hidden sizes whose full weight set no longer fits VMEM,
    # stream weights per layer (memory_space=pl.ANY + pltpu.emit_pipeline).
    xrec_p, mu_p, logvar_p = pl.pallas_call(
        kernel,
        grid=grid,
        in_specs=in_specs,
        out_specs=out_specs,
        out_shape=out_shape,
        compiler_params=pltpu.CompilerParams(
            dimension_semantics=("parallel",),
            vmem_limit_bytes=vmem_limit),
    )(x_p, eps_p, *param_arrays)

    x_recon = xrec_p[:batch, :input_dim]
    mu = mu_p[:batch, :latent_dim]
    logvar = logvar_p[:batch, :latent_dim]
    return x_recon, mu, logvar


# ----------------------------------------------------------------------------
# Parameter construction (deterministic, PyTorch-style uniform init)
# ----------------------------------------------------------------------------
def _init_linear(key, in_dim, out_dim, dtype=jnp.float32):
    kw, kb = jax.random.split(key)
    bound = 1.0 / np.sqrt(in_dim)
    w = jax.random.uniform(kw, (out_dim, in_dim), dtype, -bound, bound)
    b = jax.random.uniform(kb, (out_dim,), dtype, -bound, bound)
    return {"w": w, "b": b}


def init_vae_params(key, input_dim, hidden_size, latent_dim, num_layers):
    params = {"encoder": [], "decoder": []}
    prev = input_dim
    for _ in range(num_layers):
        key, sub = jax.random.split(key)
        params["encoder"].append(_init_linear(sub, prev, hidden_size))
        prev = hidden_size
    key, k_mu, k_lv = jax.random.split(key, 3)
    params["fc_mu"] = _init_linear(k_mu, prev, latent_dim)
    params["fc_logvar"] = _init_linear(k_lv, prev, latent_dim)
    prev = latent_dim
    for _ in range(num_layers):
        key, sub = jax.random.split(key)
        params["decoder"].append(_init_linear(sub, prev, hidden_size))
        prev = hidden_size
    key, k_out = jax.random.split(key)
    params["decoder_out"] = _init_linear(k_out, prev, input_dim)
    return params


# ----------------------------------------------------------------------------
# Pure-JAX reference (mirrors the PyTorch forward) for correctness check
# ----------------------------------------------------------------------------
def vae_reference(params, x, eps, matmul_dtype=jnp.float32):
    def lin(h, layer):
        return (jnp.dot(h.astype(matmul_dtype),
                        layer["w"].T.astype(matmul_dtype),
                        preferred_element_type=jnp.float32)
                + layer["b"].astype(jnp.float32))

    h = x.astype(jnp.float32)
    for layer in params["encoder"]:
        h = jnp.maximum(lin(h, layer), 0.0)
    mu = lin(h, params["fc_mu"])
    logvar = lin(h, params["fc_logvar"])
    z = mu + eps * jnp.exp(0.5 * logvar)
    h = z
    for layer in params["decoder"]:
        h = jnp.maximum(lin(h, layer), 0.0)
    x_recon = lin(h, params["decoder_out"])
    return x_recon, mu, logvar


# ----------------------------------------------------------------------------
# Demo
# ----------------------------------------------------------------------------
if __name__ == "__main__":
    batch = 8
    input_dim = 16
    hidden_size = 32
    latent_dim = 8
    num_layers = 2

    key = jax.random.PRNGKey(0)
    key_params, key_x, key_eps = jax.random.split(key, 3)

    params = init_vae_params(key_params, input_dim, hidden_size, latent_dim,
                             num_layers)
    x = jax.random.normal(key_x, (batch, input_dim), jnp.float32)
    # eps ~ N(0, 1), same shape as mu/logvar (stands in for torch.randn_like).
    eps = jax.random.normal(key_eps, (batch, latent_dim), jnp.float32)

    prepped = prepare_vae_params(params)        # one-time weight prep
    x_recon, mu, logvar = vae_forward(prepped, x, eps)
    jax.block_until_ready((x_recon, mu, logvar))

    assert x_recon.shape == (batch, input_dim)
    assert mu.shape == (batch, latent_dim)
    assert logvar.shape == (batch, latent_dim)

    # Precision-matched reference (bf16 matmul operands, f32 accumulate).
    xr_bf, mu_bf, lv_bf = vae_reference(params, x, eps,
                                        matmul_dtype=jnp.bfloat16)
    np.testing.assert_allclose(np.asarray(mu), np.asarray(mu_bf),
                               rtol=2e-3, atol=2e-3)
    np.testing.assert_allclose(np.asarray(logvar), np.asarray(lv_bf),
                               rtol=2e-3, atol=2e-3)
    np.testing.assert_allclose(np.asarray(x_recon), np.asarray(xr_bf),
                               rtol=2e-3, atol=2e-3)

    # Sanity check against the full-f32 reference (loose: bf16 matmul error).
    xr_f32, mu_f32, lv_f32 = vae_reference(params, x, eps)
    np.testing.assert_allclose(np.asarray(mu), np.asarray(mu_f32),
                               rtol=5e-2, atol=5e-2)
    np.testing.assert_allclose(np.asarray(logvar), np.asarray(lv_f32),
                               rtol=5e-2, atol=5e-2)
    np.testing.assert_allclose(np.asarray(x_recon), np.asarray(xr_f32),
                               rtol=5e-2, atol=5e-2)

    print("KERNEL_OK")
</pallas_src>

<mosaic_0001>
module attributes {stable_mosaic.version = 11 : i64} {
  func.func @_vae_fused_kernel(%arg0: i32, %arg1: memref<8x128xf32, #tpu.memory_space<vmem>>, %arg2: memref<8x128xf32, #tpu.memory_space<vmem>>, %arg3: memref<128x128xbf16, #tpu.memory_space<vmem>>, %arg4: memref<1x128xf32, #tpu.memory_space<vmem>>, %arg5: memref<128x128xbf16, #tpu.memory_space<vmem>>, %arg6: memref<1x128xf32, #tpu.memory_space<vmem>>, %arg7: memref<128x256xbf16, #tpu.memory_space<vmem>>, %arg8: memref<1x256xf32, #tpu.memory_space<vmem>>, %arg9: memref<128x128xbf16, #tpu.memory_space<vmem>>, %arg10: memref<1x128xf32, #tpu.memory_space<vmem>>, %arg11: memref<128x128xbf16, #tpu.memory_space<vmem>>, %arg12: memref<1x128xf32, #tpu.memory_space<vmem>>, %arg13: memref<128x128xbf16, #tpu.memory_space<vmem>>, %arg14: memref<1x128xf32, #tpu.memory_space<vmem>>, %arg15: memref<8x128xf32, #tpu.memory_space<vmem>>, %arg16: memref<8x128xf32, #tpu.memory_space<vmem>>, %arg17: memref<8x128xf32, #tpu.memory_space<vmem>>) attributes {dimension_semantics = [#tpu.dimension_semantics<parallel>], iteration_bounds = array<i64: 1>, scalar_prefetch = 0 : i64, scratch_operands = 0 : i64, tpu.core_type = #tpu.core_type<tc>, window_params = [{transform_indices = @transform_0, window_bounds = array<i64: 8, 128>}, {transform_indices = @transform_1, window_bounds = array<i64: 8, 128>}, {pipeline_mode = #tpu.pipeline_mode<synchronous>, transform_indices = @transform_2, window_bounds = array<i64: 128, 128>}, {pipeline_mode = #tpu.pipeline_mode<synchronous>, transform_indices = @transform_3, window_bounds = array<i64: 1, 128>}, {pipeline_mode = #tpu.pipeline_mode<synchronous>, transform_indices = @transform_4, window_bounds = array<i64: 128, 128>}, {pipeline_mode = #tpu.pipeline_mode<synchronous>, transform_indices = @transform_5, window_bounds = array<i64: 1, 128>}, {pipeline_mode = #tpu.pipeline_mode<synchronous>, transform_indices = @transform_6, window_bounds = array<i64: 128, 256>}, {pipeline_mode = #tpu.pipeline_mode<synchronous>, transform_indices = @transform_7, window_bounds = array<i64: 1, 256>}, {pipeline_mode = #tpu.pipeline_mode<synchronous>, transform_indices = @transform_8, window_bounds = array<i64: 128, 128>}, {pipeline_mode = #tpu.pipeline_mode<synchronous>, transform_indices = @transform_9, window_bounds = array<i64: 1, 128>}, {pipeline_mode = #tpu.pipeline_mode<synchronous>, transform_indices = @transform_10, window_bounds = array<i64: 128, 128>}, {pipeline_mode = #tpu.pipeline_mode<synchronous>, transform_indices = @transform_11, window_bounds = array<i64: 1, 128>}, {pipeline_mode = #tpu.pipeline_mode<synchronous>, transform_indices = @transform_12, window_bounds = array<i64: 128, 128>}, {pipeline_mode = #tpu.pipeline_mode<synchronous>, transform_indices = @transform_13, window_bounds = array<i64: 1, 128>}, {transform_indices = @transform_14, window_bounds = array<i64: 8, 128>}, {transform_indices = @transform_15, window_bounds = array<i64: 8, 128>}, {transform_indices = @transform_16, window_bounds = array<i64: 8, 128>}]} {
    %c0 = arith.constant 0 : index
    %c0_0 = arith.constant 0 : index
    %0 = vector.load %arg1[%c0, %c0_0] : memref<8x128xf32, #tpu.memory_space<vmem>>, vector<8x128xf32>
    %1 = arith.truncf %0 : vector<8x128xf32> to vector<8x128xbf16>
    %c0_1 = arith.constant 0 : index
    %c0_2 = arith.constant 0 : index
    %2 = vector.load %arg3[%c0_1, %c0_2] : memref<128x128xbf16, #tpu.memory_space<vmem>>, vector<128x128xbf16>
    %cst = arith.constant dense<0.000000e+00> : vector<8x128xf32>
    %3 = tpu.matmul %1, %2, %cst {dimension_numbers = #tpu.dot_dimension_numbers<[1], [0], [0], [1], [0, 0, 1, 1], [], []>} : vector<8x128xbf16>, vector<128x128xbf16>, vector<8x128xf32> -> vector<8x128xf32>
    %c0_3 = arith.constant 0 : index
    %c0_4 = arith.constant 0 : index
    %4 = vector.load %arg4[%c0_3, %c0_4] : memref<1x128xf32, #tpu.memory_space<vmem>>, vector<1x128xf32>
    %5 = vector.broadcast %4 : vector<1x128xf32> to vector<8x128xf32>
    %6 = arith.addf %3, %5 : vector<8x128xf32>
    %cst_5 = arith.constant 0.000000e+00 : f32
    %7 = vector.broadcast %cst_5 : f32 to vector<8x128xf32>
    %8 = arith.maximumf %6, %7 : vector<8x128xf32>
    %9 = arith.truncf %8 : vector<8x128xf32> to vector<8x128xbf16>
    %c0_6 = arith.constant 0 : index
    %c0_7 = arith.constant 0 : index
    %10 = vector.load %arg5[%c0_6, %c0_7] : memref<128x128xbf16, #tpu.memory_space<vmem>>, vector<128x128xbf16>
    %cst_8 = arith.constant dense<0.000000e+00> : vector<8x128xf32>
    %11 = tpu.matmul %9, %10, %cst_8 {dimension_numbers = #tpu.dot_dimension_numbers<[1], [0], [0], [1], [0, 0, 1, 1], [], []>} : vector<8x128xbf16>, vector<128x128xbf16>, vector<8x128xf32> -> vector<8x128xf32>
    %c0_9 = arith.constant 0 : index
    %c0_10 = arith.constant 0 : index
    %12 = vector.load %arg6[%c0_9, %c0_10] : memref<1x128xf32, #tpu.memory_space<vmem>>, vector<1x128xf32>
    %13 = vector.broadcast %12 : vector<1x128xf32> to vector<8x128xf32>
    %14 = arith.addf %11, %13 : vector<8x128xf32>
    %cst_11 = arith.constant 0.000000e+00 : f32
    %15 = vector.broadcast %cst_11 : f32 to vector<8x128xf32>
    %16 = arith.maximumf %14, %15 : vector<8x128xf32>
    %17 = arith.truncf %16 : vector<8x128xf32> to vector<8x128xbf16>
    %c0_12 = arith.constant 0 : index
    %c0_13 = arith.constant 0 : index
    %18 = vector.load %arg7[%c0_12, %c0_13] : memref<128x256xbf16, #tpu.memory_space<vmem>>, vector<128x256xbf16>
    %cst_14 = arith.constant dense<0.000000e+00> : vector<8x256xf32>
    %19 = tpu.matmul %17, %18, %cst_14 {dimension_numbers = #tpu.dot_dimension_numbers<[1], [0], [0], [1], [0, 0, 1, 1], [], []>} : vector<8x128xbf16>, vector<128x256xbf16>, vector<8x256xf32> -> vector<8x256xf32>
    %c0_15 = arith.constant 0 : index
    %c0_16 = arith.constant 0 : index
    %20 = vector.load %arg8[%c0_15, %c0_16] : memref<1x256xf32, #tpu.memory_space<vmem>>, vector<1x256xf32>
    %21 = vector.broadcast %20 : vector<1x256xf32> to vector<8x256xf32>
    %22 = arith.addf %19, %21 : vector<8x256xf32>
    %23 = vector.extract_strided_slice %22 {offsets = [0, 0], sizes = [8, 128], strides = [1, 1]} : vector<8x256xf32> to vector<8x128xf32>
    %24 = vector.extract_strided_slice %22 {offsets = [0, 128], sizes = [8, 128], strides = [1, 1]} : vector<8x256xf32> to vector<8x128xf32>
    %cst_17 = arith.constant 5.000000e-01 : f32
    %25 = vector.broadcast %cst_17 : f32 to vector<8x128xf32>
    %26 = arith.mulf %25, %24 : vector<8x128xf32>
    %27 = math.exp %26 : vector<8x128xf32>
    %c0_18 = arith.constant 0 : index
    %c0_19 = arith.constant 0 : index
    %28 = vector.load %arg2[%c0_18, %c0_19] : memref<8x128xf32, #tpu.memory_space<vmem>>, vector<8x128xf32>
    %29 = arith.mulf %28, %27 : vector<8x128xf32>
    %30 = arith.addf %23, %29 : vector<8x128xf32>
    %31 = arith.truncf %30 : vector<8x128xf32> to vector<8x128xbf16>
    %c0_20 = arith.constant 0 : index
    %c0_21 = arith.constant 0 : index
    %32 = vector.load %arg9[%c0_20, %c0_21] : memref<128x128xbf16, #tpu.memory_space<vmem>>, vector<128x128xbf16>
    %cst_22 = arith.constant dense<0.000000e+00> : vector<8x128xf32>
    %33 = tpu.matmul %31, %32, %cst_22 {dimension_numbers = #tpu.dot_dimension_numbers<[1], [0], [0], [1], [0, 0, 1, 1], [], []>} : vector<8x128xbf16>, vector<128x128xbf16>, vector<8x128xf32> -> vector<8x128xf32>
    %c0_23 = arith.constant 0 : index
    %c0_24 = arith.constant 0 : index
    %34 = vector.load %arg10[%c0_23, %c0_24] : memref<1x128xf32, #tpu.memory_space<vmem>>, vector<1x128xf32>
    %35 = vector.broadcast %34 : vector<1x128xf32> to vector<8x128xf32>
    %36 = arith.addf %33, %35 : vector<8x128xf32>
    %cst_25 = arith.constant 0.000000e+00 : f32
    %37 = vector.broadcast %cst_25 : f32 to vector<8x128xf32>
    %38 = arith.maximumf %36, %37 : vector<8x128xf32>
    %39 = arith.truncf %38 : vector<8x128xf32> to vector<8x128xbf16>
    %c0_26 = arith.constant 0 : index
    %c0_27 = arith.constant 0 : index
    %40 = vector.load %arg11[%c0_26, %c0_27] : memref<128x128xbf16, #tpu.memory_space<vmem>>, vector<128x128xbf16>
    %cst_28 = arith.constant dense<0.000000e+00> : vector<8x128xf32>
    %41 = tpu.matmul %39, %40, %cst_28 {dimension_numbers = #tpu.dot_dimension_numbers<[1], [0], [0], [1], [0, 0, 1, 1], [], []>} : vector<8x128xbf16>, vector<128x128xbf16>, vector<8x128xf32> -> vector<8x128xf32>
    %c0_29 = arith.constant 0 : index
    %c0_30 = arith.constant 0 : index
    %42 = vector.load %arg12[%c0_29, %c0_30] : memref<1x128xf32, #tpu.memory_space<vmem>>, vector<1x128xf32>
    %43 = vector.broadcast %42 : vector<1x128xf32> to vector<8x128xf32>
    %44 = arith.addf %41, %43 : vector<8x128xf32>
    %cst_31 = arith.constant 0.000000e+00 : f32
    %45 = vector.broadcast %cst_31 : f32 to vector<8x128xf32>
    %46 = arith.maximumf %44, %45 : vector<8x128xf32>
    %47 = arith.truncf %46 : vector<8x128xf32> to vector<8x128xbf16>
    %c0_32 = arith.constant 0 : index
    %c0_33 = arith.constant 0 : index
    %48 = vector.load %arg13[%c0_32, %c0_33] : memref<128x128xbf16, #tpu.memory_space<vmem>>, vector<128x128xbf16>
    %cst_34 = arith.constant dense<0.000000e+00> : vector<8x128xf32>
    %49 = tpu.matmul %47, %48, %cst_34 {dimension_numbers = #tpu.dot_dimension_numbers<[1], [0], [0], [1], [0, 0, 1, 1], [], []>} : vector<8x128xbf16>, vector<128x128xbf16>, vector<8x128xf32> -> vector<8x128xf32>
    %c0_35 = arith.constant 0 : index
    %c0_36 = arith.constant 0 : index
    %50 = vector.load %arg14[%c0_35, %c0_36] : memref<1x128xf32, #tpu.memory_space<vmem>>, vector<1x128xf32>
    %51 = vector.broadcast %50 : vector<1x128xf32> to vector<8x128xf32>
    %52 = arith.addf %49, %51 : vector<8x128xf32>
    %c0_37 = arith.constant 0 : index
    %c0_38 = arith.constant 0 : index
    %53 = vector.load %arg15[%c0_37, %c0_38] : memref<8x128xf32, #tpu.memory_space<vmem>>, vector<8x128xf32>
    tpu.vector_store %arg15[%c0_37, %c0_38], %52 {strides = array<i32>} : memref<8x128xf32, #tpu.memory_space<vmem>>, vector<8x128xf32>,
    %c0_39 = arith.constant 0 : index
    %c0_40 = arith.constant 0 : index
    %54 = vector.load %arg16[%c0_39, %c0_40] : memref<8x128xf32, #tpu.memory_space<vmem>>, vector<8x128xf32>
    tpu.vector_store %arg16[%c0_39, %c0_40], %23 {strides = array<i32>} : memref<8x128xf32, #tpu.memory_space<vmem>>, vector<8x128xf32>,
    %c0_41 = arith.constant 0 : index
    %c0_42 = arith.constant 0 : index
    %55 = vector.load %arg17[%c0_41, %c0_42] : memref<8x128xf32, #tpu.memory_space<vmem>>, vector<8x128xf32>
    tpu.vector_store %arg17[%c0_41, %c0_42], %24 {strides = array<i32>} : memref<8x128xf32, #tpu.memory_space<vmem>>, vector<8x128xf32>,
    return
  }
  func.func @transform_0(%arg0: i32) -> (i32, i32) {
    %c0_i32 = arith.constant 0 : i32
    %c0_i32_0 = arith.constant 0 : i32
    return %arg0, %c0_i32 : i32, i32
  }
  func.func @transform_1(%arg0: i32) -> (i32, i32) {
    %c0_i32 = arith.constant 0 : i32
    %c0_i32_0 = arith.constant 0 : i32
    return %arg0, %c0_i32 : i32, i32
  }
  func.func @transform_2(%arg0: i32) -> (i32, i32) {
    %c0_i32 = arith.constant 0 : i32
    %c0_i32_0 = arith.constant 0 : i32
    %c0_i32_1 = arith.constant 0 : i32
    return %c0_i32, %c0_i32_0 : i32, i32
  }
  func.func @transform_3(%arg0: i32) -> (i32, i32) {
    %c0_i32 = arith.constant 0 : i32
    %c0_i32_0 = arith.constant 0 : i32
    %c0_i32_1 = arith.constant 0 : i32
    return %c0_i32, %c0_i32_0 : i32, i32
  }
  func.func @transform_4(%arg0: i32) -> (i32, i32) {
    %c0_i32 = arith.constant 0 : i32
    %c0_i32_0 = arith.constant 0 : i32
    %c0_i32_1 = arith.constant 0 : i32
    return %c0_i32, %c0_i32_0 : i32, i32
  }
  func.func @transform_5(%arg0: i32) -> (i32, i32) {
    %c0_i32 = arith.constant 0 : i32
    %c0_i32_0 = arith.constant 0 : i32
    %c0_i32_1 = arith.constant 0 : i32
    return %c0_i32, %c0_i32_0 : i32, i32
  }
  func.func @transform_6(%arg0: i32) -> (i32, i32) {
    %c0_i32 = arith.constant 0 : i32
    %c0_i32_0 = arith.constant 0 : i32
    %c0_i32_1 = arith.constant 0 : i32
    return %c0_i32, %c0_i32_0 : i32, i32
  }
  func.func @transform_7(%arg0: i32) -> (i32, i32) {
    %c0_i32 = arith.constant 0 : i32
    %c0_i32_0 = arith.constant 0 : i32
    %c0_i32_1 = arith.constant 0 : i32
    return %c0_i32, %c0_i32_0 : i32, i32
  }
  func.func @transform_8(%arg0: i32) -> (i32, i32) {
    %c0_i32 = arith.constant 0 : i32
    %c0_i32_0 = arith.constant 0 : i32
    %c0_i32_1 = arith.constant 0 : i32
    return %c0_i32, %c0_i32_0 : i32, i32
  }
  func.func @transform_9(%arg0: i32) -> (i32, i32) {
    %c0_i32 = arith.constant 0 : i32
    %c0_i32_0 = arith.constant 0 : i32
    %c0_i32_1 = arith.constant 0 : i32
    return %c0_i32, %c0_i32_0 : i32, i32
  }
  func.func @transform_10(%arg0: i32) -> (i32, i32) {
    %c0_i32 = arith.constant 0 : i32
    %c0_i32_0 = arith.constant 0 : i32
    %c0_i32_1 = arith.constant 0 : i32
    return %c0_i32, %c0_i32_0 : i32, i32
  }
  func.func @transform_11(%arg0: i32) -> (i32, i32) {
    %c0_i32 = arith.constant 0 : i32
    %c0_i32_0 = arith.constant 0 : i32
    %c0_i32_1 = arith.constant 0 : i32
    return %c0_i32, %c0_i32_0 : i32, i32
  }
  func.func @transform_12(%arg0: i32) -> (i32, i32) {
    %c0_i32 = arith.constant 0 : i32
    %c0_i32_0 = arith.constant 0 : i32
    %c0_i32_1 = arith.constant 0 : i32
    return %c0_i32, %c0_i32_0 : i32, i32
  }
  func.func @transform_13(%arg0: i32) -> (i32, i32) {
    %c0_i32 = arith.constant 0 : i32
    %c0_i32_0 = arith.constant 0 : i32
    %c0_i32_1 = arith.constant 0 : i32
    return %c0_i32, %c0_i32_0 : i32, i32
  }
  func.func @transform_14(%arg0: i32) -> (i32, i32) {
    %c0_i32 = arith.constant 0 : i32
    %c0_i32_0 = arith.constant 0 : i32
    return %arg0, %c0_i32 : i32, i32
  }
  func.func @transform_15(%arg0: i32) -> (i32, i32) {
    %c0_i32 = arith.constant 0 : i32
    %c0_i32_0 = arith.constant 0 : i32
    return %arg0, %c0_i32 : i32, i32
  }
  func.func @transform_16(%arg0: i32) -> (i32, i32) {
    %c0_i32 = arith.constant 0 : i32
    %c0_i32_0 = arith.constant 0 : i32
    return %arg0, %c0_i32 : i32, i32
  }
}

</mosaic_0001>

<llo_original>
// kernel: tpu_custom_call.1
$region0: #{tpu_custom_call.1}
  #allocation0 [shape = 'u32[]', space=smem, size = 0x4, offset = 0x4, fixed_abs, tag = 'smem constant byte address 0x4 - core index']
  #allocation1 [shape = 'u32[144,128]{1,0:T(1,128)}', space=vmem, size = 0x12000, scoped, tag = 'internal scratch']
  %s0 = inlined_call_operand.hbm [shape: f32[8,128], index: 0, kind: input, shape index: {}]
  %s1 = inlined_call_operand.hbm [shape: f32[8,128], index: 1, kind: input, shape index: {}]
  %s2 = inlined_call_operand.hbm [shape: bf16[128,128], index: 2, kind: input, shape index: {}]
  %s3 = inlined_call_operand.vmem [shape: f32[1,128], index: 3, kind: input, shape index: {}]
  %s4 = inlined_call_operand.hbm [shape: bf16[128,128], index: 4, kind: input, shape index: {}]
  %s5 = inlined_call_operand.vmem [shape: f32[1,128], index: 5, kind: input, shape index: {}]
  %s6 = inlined_call_operand.hbm [shape: bf16[128,256], index: 6, kind: input, shape index: {}]
  %s7 = inlined_call_operand.vmem [shape: f32[1,256], index: 7, kind: input, shape index: {}]
  %s8 = inlined_call_operand.hbm [shape: bf16[128,128], index: 8, kind: input, shape index: {}]
  %s9 = inlined_call_operand.vmem [shape: f32[1,128], index: 9, kind: input, shape index: {}]
  %s10 = inlined_call_operand.hbm [shape: bf16[128,128], index: 10, kind: input, shape index: {}]
  %s11 = inlined_call_operand.vmem [shape: f32[1,128], index: 11, kind: input, shape index: {}]
  %s12 = inlined_call_operand.hbm [shape: bf16[128,128], index: 12, kind: input, shape index: {}]
  %s13 = inlined_call_operand.vmem [shape: f32[1,128], index: 13, kind: input, shape index: {}]
  %s14 = inlined_call_operand.hbm [shape: f32[8,128], index: 14, kind: output, shape index: {0}]
  %s15 = inlined_call_operand.hbm [shape: f32[8,128], index: 15, kind: output, shape index: {1}]
  %s16 = inlined_call_operand.hbm [shape: f32[8,128], index: 16, kind: output, shape index: {2}]
  %17 = xla_tuple %s14, %s15, %s16
  %s18 = sld [smem:[#allocation0]]
  $region114: #{tpu_custom_call.1} parent=0
    _
  %s20 = ssub.s32 1, %s18
  %s21 = scalar_select 0, %s20, %s18
  $region1: #{tpu_custom_call.1} parent=0
    #allocation2 [shape = 'u8[4096]{0}', space=vmem, size = 0x1000, scoped, tag = 'input window, operand 0, single buffered']
    #allocation3 [shape = 's32[1]{0}', space=sflag, size = 0x4, scoped, tag = 'scoped memory for tpu_custom_call.1']
    #allocation4 [shape = 's32[1]{0}', space=sflag, size = 0x4, scoped, tag = 'scoped memory for tpu_custom_call.1']
    #allocation5 [shape = 'u8[4096]{0}', space=vmem, size = 0x1000, scoped, tag = 'input window, operand 1, single buffered']
    #allocation6 [shape = 's32[1]{0}', space=sflag, size = 0x4, scoped, tag = 'scoped memory for tpu_custom_call.1']
    #allocation7 [shape = 'u8[32768]{0}', space=vmem, size = 0x8000, scoped, tag = 'input window, operand 2, single buffered']
    #allocation8 [shape = 'u8[32768]{0}', space=vmem, size = 0x8000, scoped, tag = 'input window, operand 4, single buffered']
    #allocation9 [shape = 's32[1]{0}', space=sflag, size = 0x4, scoped, tag = 'scoped memory for tpu_custom_call.1']
    #allocation10 [shape = 'u8[65536]{0}', space=vmem, size = 0x10000, scoped, tag = 'input window, operand 6, single buffered']
    #allocation11 [shape = 'u8[32768]{0}', space=vmem, size = 0x8000, scoped, tag = 'input window, operand 8, single buffered']
    #allocation12 [shape = 's32[1]{0}', space=sflag, size = 0x4, scoped, tag = 'scoped memory for tpu_custom_call.1']
    #allocation13 [shape = 'u8[32768]{0}', space=vmem, size = 0x8000, scoped, tag = 'input window, operand 10, single buffered']
    #allocation14 [shape = 'u8[32768]{0}', space=vmem, size = 0x8000, scoped, tag = 'input window, operand 12, single buffered']
    #allocation15 [shape = 's32[1]{0}', space=sflag, size = 0x4, scoped, tag = 'scoped memory for tpu_custom_call.1']
    #allocation16 [shape = 'u8[4096]{0}', space=vmem, size = 0x1000, scoped, tag = 'output window, operand 0, single buffered']
    #allocation17 [shape = 'u8[4096]{0}', space=vmem, size = 0x1000, scoped, tag = 'output window, operand 1, single buffered']
    #allocation18 [shape = 's32[1]{0}', space=sflag, size = 0x4, scoped, tag = 'scoped memory for tpu_custom_call.1']
    #allocation19 [shape = 'u8[4096]{0}', space=vmem, size = 0x1000, scoped, tag = 'output window, operand 2, single buffered']
    %22 = vsyncpa [#allocation3], 0
    %23 = vsyncpa [#allocation6], 0
    %24 = vsyncpa [#allocation9], 0
    %25 = vsyncpa [#allocation12], 0
    %26 = vsyncpa [#allocation15], 0
    %27 = vsyncpa [#allocation4], 0
    %28 = vsyncpa [#allocation18], 0
    // Predicated region
    $region2: #{tpu_custom_call.1} parent=1 // pred_check
      _
    $region3: #{tpu_custom_call.1} parent=1 // pred_check_branch
      %30 = sbr.rel (0) target = $region5
    $region4: #{tpu_custom_call.1} parent=1 // pred_region
      %s32 = ssub.s32 128, 128
      %33 = vsyncadd [#allocation3], %s32
      %s35 = sshll.u32 [#allocation2], 4
      %s36 = int_to_ptr.vmem [resolvable:$true] %s35
      %38 = dma.hbm_to_vmem [thread:$0]  %s0, 128, %s36, [#allocation3]
    $region5: #{tpu_custom_call.1} parent=1 // pred_fallthru
      _
    // Predicated region
    $region6: #{tpu_custom_call.1} parent=1 // pred_check
      _
    $region7: #{tpu_custom_call.1} parent=1 // pred_check_branch
      %40 = sbr.rel (0) target = $region9
    $region8: #{tpu_custom_call.1} parent=1 // pred_region
      %s42 = ssub.s32 128, 128
      %43 = vsyncadd [#allocation6], %s42
      %s45 = sshll.u32 [#allocation5], 4
      %s46 = int_to_ptr.vmem [resolvable:$true] %s45
      %48 = dma.hbm_to_vmem [thread:$0]  %s1, 128, %s46, [#allocation6]
    $region9: #{tpu_custom_call.1} parent=1 // pred_fallthru
      _
    // Predicated region
    $region10: #{tpu_custom_call.1} parent=1 // pred_check
      _
    $region11: #{tpu_custom_call.1} parent=1 // pred_check_branch
      %50 = sbr.rel (0) target = $region13
    $region12: #{tpu_custom_call.1} parent=1 // pred_region
      %s52 = ssub.s32 1024, 1024
      %53 = vsyncadd [#allocation6], %s52
      %s54 = sshll.u32 [#allocation7], 4
      %s55 = int_to_ptr.vmem [resolvable:$true] %s54
      %60 = dma.hbm_to_vmem [thread:$0]  %s2, 1024, %s55, [#allocation6], 64, 64, 4
    $region13: #{tpu_custom_call.1} parent=1 // pred_fallthru
      _
    // Predicated region
    $region14: #{tpu_custom_call.1} parent=1 // pred_check
      _
    $region15: #{tpu_custom_call.1} parent=1 // pred_check_branch
      %62 = sbr.rel (0) target = $region17
    $region16: #{tpu_custom_call.1} parent=1 // pred_region
      _
    $region17: #{tpu_custom_call.1} parent=1 // pred_fallthru
      _
    // Predicated region
    $region18: #{tpu_custom_call.1} parent=1 // pred_check
      _
    $region19: #{tpu_custom_call.1} parent=1 // pred_check_branch
      %64 = sbr.rel (0) target = $region21
    $region20: #{tpu_custom_call.1} parent=1 // pred_region
      %s66 = ssub.s32 1024, 1024
      %67 = vsyncadd [#allocation9], %s66
      %s68 = sshll.u32 [#allocation8], 4
      %s69 = int_to_ptr.vmem [resolvable:$true] %s68
      %74 = dma.hbm_to_vmem [thread:$0]  %s4, 1024, %s69, [#allocation9], 64, 64, 4
    $region21: #{tpu_custom_call.1} parent=1 // pred_fallthru
      _
    // Predicated region
    $region22: #{tpu_custom_call.1} parent=1 // pred_check
      _
    $region23: #{tpu_custom_call.1} parent=1 // pred_check_branch
      %76 = sbr.rel (0) target = $region25
    $region24: #{tpu_custom_call.1} parent=1 // pred_region
      _
    $region25: #{tpu_custom_call.1} parent=1 // pred_fallthru
      _
    // Predicated region
    $region26: #{tpu_custom_call.1} parent=1 // pred_check
      _
    $region27: #{tpu_custom_call.1} parent=1 // pred_check_branch
      %78 = sbr.rel (0) target = $region29
    $region28: #{tpu_custom_call.1} parent=1 // pred_region
      %s80 = ssub.s32 2048, 2048
      %81 = vsyncadd [#allocation9], %s80
      %s82 = sshll.u32 [#allocation10], 4
      %s83 = int_to_ptr.vmem [resolvable:$true] %s82
      %88 = dma.hbm_to_vmem [thread:$0]  %s6, 2048, %s83, [#allocation9], 128, 128, 8
    $region29: #{tpu_custom_call.1} parent=1 // pred_fallthru
      _
    // Predicated region
    $region30: #{tpu_custom_call.1} parent=1 // pred_check
      _
    $region31: #{tpu_custom_call.1} parent=1 // pred_check_branch
      %90 = sbr.rel (0) target = $region33
    $region32: #{tpu_custom_call.1} parent=1 // pred_region
      _
    $region33: #{tpu_custom_call.1} parent=1 // pred_fallthru
      _
    // Predicated region
    $region34: #{tpu_custom_call.1} parent=1 // pred_check
      _
    $region35: #{tpu_custom_call.1} parent=1 // pred_check_branch
      %92 = sbr.rel (0) target = $region37
    $region36: #{tpu_custom_call.1} parent=1 // pred_region
      %s94 = ssub.s32 1024, 1024
      %95 = vsyncadd [#allocation12], %s94
      %s96 = sshll.u32 [#allocation11], 4
      %s97 = int_to_ptr.vmem [resolvable:$true] %s96
      %102 = dma.hbm_to_vmem [thread:$0]  %s8, 1024, %s97, [#allocation12], 64, 64, 4
    $region37: #{tpu_custom_call.1} parent=1 // pred_fallthru
      _
    // Predicated region
    $region38: #{tpu_custom_call.1} parent=1 // pred_check
      _
    $region39: #{tpu_custom_call.1} parent=1 // pred_check_branch
      %104 = sbr.rel (0) target = $region41
    $region40: #{tpu_custom_call.1} parent=1 // pred_region
      _
    $region41: #{tpu_custom_call.1} parent=1 // pred_fallthru
      _
    // Predicated region
    $region42: #{tpu_custom_call.1} parent=1 // pred_check
      _
    $region43: #{tpu_custom_call.1} parent=1 // pred_check_branch
      %106 = sbr.rel (0) target = $region45
    $region44: #{tpu_custom_call.1} parent=1 // pred_region
      %s108 = ssub.s32 1024, 1024
      %109 = vsyncadd [#allocation12], %s108
      %s110 = sshll.u32 [#allocation13], 4
      %s111 = int_to_ptr.vmem [resolvable:$true] %s110
      %116 = dma.hbm_to_vmem [thread:$0]  %s10, 1024, %s111, [#allocation12], 64, 64, 4
    $region45: #{tpu_custom_call.1} parent=1 // pred_fallthru
      _
    // Predicated region
    $region46: #{tpu_custom_call.1} parent=1 // pred_check
      _
    $region47: #{tpu_custom_call.1} parent=1 // pred_check_branch
      %118 = sbr.rel (0) target = $region49
    $region48: #{tpu_custom_call.1} parent=1 // pred_region
      _
    $region49: #{tpu_custom_call.1} parent=1 // pred_fallthru
      _
    // Predicated region
    $region50: #{tpu_custom_call.1} parent=1 // pred_check
      _
    $region51: #{tpu_custom_call.1} parent=1 // pred_check_branch
      %120 = sbr.rel (0) target = $region53
    $region52: #{tpu_custom_call.1} parent=1 // pred_region
      %s122 = ssub.s32 1024, 1024
      %123 = vsyncadd [#allocation15], %s122
      %s124 = sshll.u32 [#allocation14], 4
      %s125 = int_to_ptr.vmem [resolvable:$true] %s124
      %130 = dma.hbm_to_vmem [thread:$0]  %s12, 1024, %s125, [#allocation15], 64, 64, 4
    $region53: #{tpu_custom_call.1} parent=1 // pred_fallthru
      _
    // Predicated region
    $region54: #{tpu_custom_call.1} parent=1 // pred_check
      _
    $region55: #{tpu_custom_call.1} parent=1 // pred_check_branch
      %132 = sbr.rel (0) target = $region57
    $region56: #{tpu_custom_call.1} parent=1 // pred_region
      _
    $region57: #{tpu_custom_call.1} parent=1 // pred_fallthru
      _
    // Predicated region
    $region58: #{tpu_custom_call.1} parent=1 // pred_check
      _
    $region59: #{tpu_custom_call.1} parent=1 // pred_check_branch
      %134 = sbr.rel (0) target = $region61
    $region60: #{tpu_custom_call.1} parent=1 // pred_region
      %135 = dma.done [#allocation3], 128
    $region61: #{tpu_custom_call.1} parent=1 // pred_fallthru
      _
    // Predicated region
    $region62: #{tpu_custom_call.1} parent=1 // pred_check
      _
    $region63: #{tpu_custom_call.1} parent=1 // pred_check_branch
      %137 = sbr.rel (0) target = $region65
    $region64: #{tpu_custom_call.1} parent=1 // pred_region
      %138 = dma.done [#allocation6], 128
    $region65: #{tpu_custom_call.1} parent=1 // pred_fallthru
      _
    // Predicated region
    $region66: #{tpu_custom_call.1} parent=1 // pred_check
      _
    $region67: #{tpu_custom_call.1} parent=1 // pred_check_branch
      %140 = sbr.rel (0) target = $region69
    $region68: #{tpu_custom_call.1} parent=1 // pred_region
      %141 = dma.done [#allocation6], 1024
    $region69: #{tpu_custom_call.1} parent=1 // pred_fallthru
      _
    // Predicated region
    $region70: #{tpu_custom_call.1} parent=1 // pred_check
      _
    $region71: #{tpu_custom_call.1} parent=1 // pred_check_branch
      %143 = sbr.rel (0) target = $region73
    $region72: #{tpu_custom_call.1} parent=1 // pred_region
      %144 = dma.done [#allocation9], 1024
    $region73: #{tpu_custom_call.1} parent=1 // pred_fallthru
      _
    // Predicated region
    $region74: #{tpu_custom_call.1} parent=1 // pred_check
      _
    $region75: #{tpu_custom_call.1} parent=1 // pred_check_branch
      %146 = sbr.rel (0) target = $region77
    $region76: #{tpu_custom_call.1} parent=1 // pred_region
      %147 = dma.done [#allocation9], 2048
    $region77: #{tpu_custom_call.1} parent=1 // pred_fallthru
      _
    // Predicated region
    $region78: #{tpu_custom_call.1} parent=1 // pred_check
      _
    $region79: #{tpu_custom_call.1} parent=1 // pred_check_branch
      %149 = sbr.rel (0) target = $region81
    $region80: #{tpu_custom_call.1} parent=1 // pred_region
      %150 = dma.done [#allocation12], 1024
    $region81: #{tpu_custom_call.1} parent=1 // pred_fallthru
      _
    // Predicated region
    $region82: #{tpu_custom_call.1} parent=1 // pred_check
      _
    $region83: #{tpu_custom_call.1} parent=1 // pred_check_branch
      %152 = sbr.rel (0) target = $region85
    $region84: #{tpu_custom_call.1} parent=1 // pred_region
      %153 = dma.done [#allocation12], 1024
    $region85: #{tpu_custom_call.1} parent=1 // pred_fallthru
      _
    // Predicated region
    $region86: #{tpu_custom_call.1} parent=1 // pred_check
      _
    $region87: #{tpu_custom_call.1} parent=1 // pred_check_branch
      %155 = sbr.rel (0) target = $region89
    $region88: #{tpu_custom_call.1} parent=1 // pred_region
      %156 = dma.done [#allocation15], 1024
    $region89: #{tpu_custom_call.1} parent=1 // pred_fallthru
      _
    %v158 = vld [vmem:[#allocation2] sm:$0xff]
    %v159 = vpack.c.bf16 %v158, %v158
    %v160 = vld [vmem:[#allocation7] sm:$0xf]
    %v161 = vld [vmem:[#allocation7 + $0x4] sm:$0xf]
    %v162 = vld [vmem:[#allocation7 + $0x8] sm:$0xf]
    %v163 = vld [vmem:[#allocation7 + $0xc] sm:$0xf]
    %v164 = vld [vmem:[#allocation7 + $0x10] sm:$0xf]
    %v165 = vld [vmem:[#allocation7 + $0x14] sm:$0xf]
    %v166 = vld [vmem:[#allocation7 + $0x18] sm:$0xf]
    %v167 = vld [vmem:[#allocation7 + $0x1c] sm:$0xf]
    %v168 = vld [vmem:[#allocation7 + $0x20] sm:$0xf]
    %v169 = vld [vmem:[#allocation7 + $0x24] sm:$0xf]
    %v170 = vld [vmem:[#allocation7 + $0x28] sm:$0xf]
    %v171 = vld [vmem:[#allocation7 + $0x2c] sm:$0xf]
    %v172 = vld [vmem:[#allocation7 + $0x30] sm:$0xf]
    %v173 = vld [vmem:[#allocation7 + $0x34] sm:$0xf]
    %v174 = vld [vmem:[#allocation7 + $0x38] sm:$0xf]
    %v175 = vld [vmem:[#allocation7 + $0x3c] sm:$0xf]
    %v176 = vld [vmem:[%s3] sm:$0x1]
    %v178 = vlaneseq
    %v179 = vshrl.u32 %v178, 7
    %v180 = vsub.s32 0, %v179
    %v181 = vrot.slane %v176, %v180
    %v199 = vunpack.c.l.b16 %v160
    %v200 = vunpack.c.l.b16 %v161
    %v201 = vunpack.c.l.b16 %v162
    %v202 = vunpack.c.l.b16 %v163
    %v203 = vunpack.c.l.b16 %v164
    %v204 = vunpack.c.l.b16 %v165
    %v205 = vunpack.c.l.b16 %v166
    %v206 = vunpack.c.l.b16 %v167
    %v207 = vunpack.c.l.b16 %v168
    %v208 = vunpack.c.l.b16 %v169
    %v209 = vunpack.c.l.b16 %v170
    %v210 = vunpack.c.l.b16 %v171
    %v211 = vunpack.c.l.b16 %v172
    %v212 = vunpack.c.l.b16 %v173
    %v213 = vunpack.c.l.b16 %v174
    %v214 = vunpack.c.l.b16 %v175
    %v215 = vpack.c.b16 %v200, %v199
    %v216 = vpack.c.b16 %v202, %v201
    %v217 = vpack.c.b16 %v204, %v203
    %v218 = vpack.c.b16 %v206, %v205
    %v219 = vpack.c.b16 %v208, %v207
    %v220 = vpack.c.b16 %v210, %v209
    %v221 = vpack.c.b16 %v212, %v211
    %v222 = vpack.c.b16 %v214, %v213
    %231 = vmatprep.subr.bf16.mxu0 0
    %232 = vmatpush1.bf16.msra.mxu0 %v215
    %233 = vmatprep.subr.bf16.mxu0 0
    %234 = vmatpush1.bf16.msra.mxu0 %v216
    %235 = vmatprep.subr.bf16.mxu0 0
    %236 = vmatpush1.bf16.msra.mxu0 %v217
    %237 = vmatprep.subr.bf16.mxu0 0
    %238 = vmatpush1.bf16.msra.mxu0 %v218
    %239 = vmatprep.subr.bf16.mxu0 0
    %240 = vmatpush1.bf16.msra.mxu0 %v219
    %241 = vmatprep.subr.bf16.mxu0 0
    %242 = vmatpush1.bf16.msra.mxu0 %v220
    %243 = vmatprep.subr.bf16.mxu0 0
    %244 = vmatpush1.bf16.msra.mxu0 %v221
    %245 = vmatprep.subr.bf16.mxu0 0
    %246 = vmatpush1.bf16.msra.mxu0 %v222
    %247 = vmatprep.subr.bf16.mxu0 0
    %248 = vmatpush1.bf16.msra.mxu0 0
    %249 = vmatprep.subr.bf16.mxu0 0
    %250 = vmatpush1.bf16.msra.mxu0 0
    %251 = vmatprep.subr.bf16.mxu0 0
    %252 = vmatpush1.bf16.msra.mxu0 0
    %253 = vmatprep.subr.bf16.mxu0 0
    %254 = vmatpush1.bf16.msra.mxu0 0
    %255 = vmatprep.subr.bf16.mxu0 0
    %256 = vmatpush1.bf16.msra.mxu0 0
    %257 = vmatprep.subr.bf16.mxu0 0
    %258 = vmatpush1.bf16.msra.mxu0 0
    %259 = vmatprep.subr.bf16.mxu0 0
    %260 = vmatpush1.bf16.msra.mxu0 0
    %261 = vmatprep.subr.bf16.mxu0 0
    %262 = vmatpush1.bf16.msra.mxu0 0
    %263 = vmatprep.mubr.bf16.mxu0 0
    %264 = vmatmul.mubr.bf16.gmra.mrb[0].mxu0 %v159
    %v265 = vpop.f32.mrb[0].mxu0
    %v266 = vadd.f32 %v181, %v265
    %v267 = vpop.f32.mrb[0].mxu0
    %v268 = vpop.f32.mrb[0].mxu0
    %v269 = vpop.f32.mrb[0].mxu0
    %270 = vdwg.mxu0
    %v271 = vmax.f32 %v266, 0.0
    %v272 = vpack.c.bf16 %v271, %v271
    %v273 = vld [vmem:[#allocation8] sm:$0xf]
    %v274 = vld [vmem:[#allocation8 + $0x4] sm:$0xf]
    %v275 = vld [vmem:[#allocation8 + $0x8] sm:$0xf]
    %v276 = vld [vmem:[#allocation8 + $0xc] sm:$0xf]
    %v277 = vld [vmem:[#allocation8 + $0x10] sm:$0xf]
    %v278 = vld [vmem:[#allocation8 + $0x14] sm:$0xf]
    %v279 = vld [vmem:[#allocation8 + $0x18] sm:$0xf]
    %v280 = vld [vmem:[#allocation8 + $0x1c] sm:$0xf]
    %v281 = vld [vmem:[#allocation8 + $0x20] sm:$0xf]
    %v282 = vld [vmem:[#allocation8 + $0x24] sm:$0xf]
    %v283 = vld [vmem:[#allocation8 + $0x28] sm:$0xf]
    %v284 = vld [vmem:[#allocation8 + $0x2c] sm:$0xf]
    %v285 = vld [vmem:[#allocation8 + $0x30] sm:$0xf]
    %v286 = vld [vmem:[#allocation8 + $0x34] sm:$0xf]
    %v287 = vld [vmem:[#allocation8 + $0x38] sm:$0xf]
    %v288 = vld [vmem:[#allocation8 + $0x3c] sm:$0xf]
    %v289 = vld [vmem:[%s5] sm:$0x1]
    %v291 = vlaneseq
    %v292 = vshrl.u32 %v291, 7
    %v293 = vsub.s32 0, %v292
    %v294 = vrot.slane %v289, %v293
    %v312 = vunpack.c.l.b16 %v273
    %v313 = vunpack.c.l.b16 %v274
    %v314 = vunpack.c.l.b16 %v275
    %v315 = vunpack.c.l.b16 %v276
    %v316 = vunpack.c.l.b16 %v277
    %v317 = vunpack.c.l.b16 %v278
    %v318 = vunpack.c.l.b16 %v279
    %v319 = vunpack.c.l.b16 %v280
    %v320 = vunpack.c.l.b16 %v281
    %v321 = vunpack.c.l.b16 %v282
    %v322 = vunpack.c.l.b16 %v283
    %v323 = vunpack.c.l.b16 %v284
    %v324 = vunpack.c.l.b16 %v285
    %v325 = vunpack.c.l.b16 %v286
    %v326 = vunpack.c.l.b16 %v287
    %v327 = vunpack.c.l.b16 %v288
    %v328 = vpack.c.b16 %v313, %v312
    %v329 = vpack.c.b16 %v315, %v314
    %v330 = vpack.c.b16 %v317, %v316
    %v331 = vpack.c.b16 %v319, %v318
    %v332 = vpack.c.b16 %v321, %v320
    %v333 = vpack.c.b16 %v323, %v322
    %v334 = vpack.c.b16 %v325, %v324
    %v335 = vpack.c.b16 %v327, %v326
    %344 = vmatprep.subr.bf16.mxu0 0
    %345 = vmatpush1.bf16.msra.mxu0 %v328
    %346 = vmatprep.subr.bf16.mxu0 0
    %347 = vmatpush1.bf16.msra.mxu0 %v329
    %348 = vmatprep.subr.bf16.mxu0 0
    %349 = vmatpush1.bf16.msra.mxu0 %v330
    %350 = vmatprep.subr.bf16.mxu0 0
    %351 = vmatpush1.bf16.msra.mxu0 %v331
    %352 = vmatprep.subr.bf16.mxu0 0
    %353 = vmatpush1.bf16.msra.mxu0 %v332
    %354 = vmatprep.subr.bf16.mxu0 0
    %355 = vmatpush1.bf16.msra.mxu0 %v333
    %356 = vmatprep.subr.bf16.mxu0 0
    %357 = vmatpush1.bf16.msra.mxu0 %v334
    %358 = vmatprep.subr.bf16.mxu0 0
    %359 = vmatpush1.bf16.msra.mxu0 %v335
    %360 = vmatprep.subr.bf16.mxu0 0
    %361 = vmatpush1.bf16.msra.mxu0 0
    %362 = vmatprep.subr.bf16.mxu0 0
    %363 = vmatpush1.bf16.msra.mxu0 0
    %364 = vmatprep.subr.bf16.mxu0 0
    %365 = vmatpush1.bf16.msra.mxu0 0
    %366 = vmatprep.subr.bf16.mxu0 0
    %367 = vmatpush1.bf16.msra.mxu0 0
    %368 = vmatprep.subr.bf16.mxu0 0
    %369 = vmatpush1.bf16.msra.mxu0 0
    %370 = vmatprep.subr.bf16.mxu0 0
    %371 = vmatpush1.bf16.msra.mxu0 0
    %372 = vmatprep.subr.bf16.mxu0 0
    %373 = vmatpush1.bf16.msra.mxu0 0
    %374 = vmatprep.subr.bf16.mxu0 0
    %375 = vmatpush1.bf16.msra.mxu0 0
    %376 = vmatprep.mubr.bf16.mxu0 0
    %377 = vmatmul.mubr.bf16.gmra.mrb[0].mxu0 %v272
    %v378 = vpop.f32.mrb[0].mxu0
    %v379 = vadd.f32 %v294, %v378
    %v380 = vpop.f32.mrb[0].mxu0
    %v381 = vpop.f32.mrb[0].mxu0
    %v382 = vpop.f32.mrb[0].mxu0
    %383 = vdwg.mxu0
    %v384 = vmax.f32 %v379, 0.0
    %v385 = vpack.c.bf16 %v384, %v384
    %v386 = vld [vmem:[#allocation10] sm:$0xff]
    %v387 = vld [vmem:[#allocation10 + $0x8] sm:$0xff]
    %v388 = vld [vmem:[#allocation10 + $0x10] sm:$0xff]
    %v389 = vld [vmem:[#allocation10 + $0x18] sm:$0xff]
    %v390 = vld [vmem:[#allocation10 + $0x20] sm:$0xff]
    %v391 = vld [vmem:[#allocation10 + $0x28] sm:$0xff]
    %v392 = vld [vmem:[#allocation10 + $0x30] sm:$0xff]
    %v393 = vld [vmem:[#allocation10 + $0x38] sm:$0xff]
    %v394 = vld [vmem:[#allocation10 + $0x40] sm:$0xff]
    %v395 = vld [vmem:[#allocation10 + $0x48] sm:$0xff]
    %v396 = vld [vmem:[#allocation10 + $0x50] sm:$0xff]
    %v397 = vld [vmem:[#allocation10 + $0x58] sm:$0xff]
    %v398 = vld [vmem:[#allocation10 + $0x60] sm:$0xff]
    %v399 = vld [vmem:[#allocation10 + $0x68] sm:$0xff]
    %v400 = vld [vmem:[#allocation10 + $0x70] sm:$0xff]
    %v401 = vld [vmem:[#allocation10 + $0x78] sm:$0xff]
    %v402 = vld [vmem:[%s7] sm:$0x3]
    %v404 = vlaneseq
    %v405 = vshrl.u32 %v404, 7
    %v406 = vsub.s32 0, %v405
    %v407 = vrot.slane %v402, %v406
    %v408 = vlaneseq
    %v409 = vshrl.u32 %v408, 7
    %v410 = vsub.s32 1, %v409
    %v411 = vrot.slane %v402, %v410
    %v430 = vunpack.c.l.b16 %v386
    %v431 = vunpack.c.h.b16 %v386
    %v432 = vunpack.c.l.b16 %v387
    %v433 = vunpack.c.h.b16 %v387
    %v434 = vunpack.c.l.b16 %v388
    %v435 = vunpack.c.h.b16 %v388
    %v436 = vunpack.c.l.b16 %v389
    %v437 = vunpack.c.h.b16 %v389
    %v438 = vunpack.c.l.b16 %v390
    %v439 = vunpack.c.h.b16 %v390
    %v440 = vunpack.c.l.b16 %v391
    %v441 = vunpack.c.h.b16 %v391
    %v442 = vunpack.c.l.b16 %v392
    %v443 = vunpack.c.h.b16 %v392
    %v444 = vunpack.c.l.b16 %v393
    %v445 = vunpack.c.h.b16 %v393
    %v446 = vunpack.c.l.b16 %v394
    %v447 = vunpack.c.h.b16 %v394
    %v448 = vunpack.c.l.b16 %v395
    %v449 = vunpack.c.h.b16 %v395
    %v450 = vunpack.c.l.b16 %v396
    %v451 = vunpack.c.h.b16 %v396
    %v452 = vunpack.c.l.b16 %v397
    %v453 = vunpack.c.h.b16 %v397
    %v454 = vunpack.c.l.b16 %v398
    %v455 = vunpack.c.h.b16 %v398
    %v456 = vunpack.c.l.b16 %v399
    %v457 = vunpack.c.h.b16 %v399
    %v458 = vunpack.c.l.b16 %v400
    %v459 = vunpack.c.h.b16 %v400
    %v460 = vunpack.c.l.b16 %v401
    %v461 = vunpack.c.h.b16 %v401
    %v462 = vpack.c.b16 %v432, %v430
    %v463 = vpack.c.b16 %v433, %v431
    %v464 = vpack.c.b16 %v436, %v434
    %v465 = vpack.c.b16 %v437, %v435
    %v466 = vpack.c.b16 %v440, %v438
    %v467 = vpack.c.b16 %v441, %v439
    %v468 = vpack.c.b16 %v444, %v442
    %v469 = vpack.c.b16 %v445, %v443
    %v470 = vpack.c.b16 %v448, %v446
    %v471 = vpack.c.b16 %v449, %v447
    %v472 = vpack.c.b16 %v452, %v450
    %v473 = vpack.c.b16 %v453, %v451
    %v474 = vpack.c.b16 %v456, %v454
    %v475 = vpack.c.b16 %v457, %v455
    %v476 = vpack.c.b16 %v460, %v458
    %v477 = vpack.c.b16 %v461, %v459
    %494 = vmatprep.subr.bf16.mxu0 %v463
    %495 = vmatpush1.bf16.msra.mxu0 %v462
    %496 = vmatprep.subr.bf16.mxu0 %v465
    %497 = vmatpush1.bf16.msra.mxu0 %v464
    %498 = vmatprep.subr.bf16.mxu0 %v467
    %499 = vmatpush1.bf16.msra.mxu0 %v466
    %500 = vmatprep.subr.bf16.mxu0 %v469
    %501 = vmatpush1.bf16.msra.mxu0 %v468
    %502 = vmatprep.subr.bf16.mxu0 %v471
    %503 = vmatpush1.bf16.msra.mxu0 %v470
    %504 = vmatprep.subr.bf16.mxu0 %v473
    %505 = vmatpush1.bf16.msra.mxu0 %v472
    %506 = vmatprep.subr.bf16.mxu0 %v475
    %507 = vmatpush1.bf16.msra.mxu0 %v474
    %508 = vmatprep.subr.bf16.mxu0 %v477
    %509 = vmatpush1.bf16.msra.mxu0 %v476
    %510 = vmatprep.subr.bf16.mxu0 0
    %511 = vmatpush1.bf16.msra.mxu0 0
    %512 = vmatprep.subr.bf16.mxu0 0
    %513 = vmatpush1.bf16.msra.mxu0 0
    %514 = vmatprep.subr.bf16.mxu0 0
    %515 = vmatpush1.bf16.msra.mxu0 0
    %516 = vmatprep.subr.bf16.mxu0 0
    %517 = vmatpush1.bf16.msra.mxu0 0
    %518 = vmatprep.subr.bf16.mxu0 0
    %519 = vmatpush1.bf16.msra.mxu0 0
    %520 = vmatprep.subr.bf16.mxu0 0
    %521 = vmatpush1.bf16.msra.mxu0 0
    %522 = vmatprep.subr.bf16.mxu0 0
    %523 = vmatpush1.bf16.msra.mxu0 0
    %524 = vmatprep.subr.bf16.mxu0 0
    %525 = vmatpush1.bf16.msra.mxu0 0
    %526 = vmatprep.mubr.bf16.mxu0 0
    %527 = vmatmul.mubr.bf16.gmra.mrb[0].mxu0 %v385
    %v528 = vpop.f32.mrb[0].mxu0
    %v529 = vadd.f32 %v407, %v528
    %v530 = vpop.f32.mrb[0].mxu0
    %v531 = vadd.f32 %v411, %v530
    %v532 = vpop.f32.mrb[0].mxu0
    %v533 = vpop.f32.mrb[0].mxu0
    %534 = vdwg.mxu0
    %v535 = vmul.f32 %v531, 0.5
    %v536 = vmul.f32 %v535, 1.442695
    %v537 = vpow.pop %v536
    %v538 = vld [vmem:[#allocation5] sm:$0xff]
    %v539 = vmul.f32 %v538, %v537
    %v540 = vadd.f32 %v529, %v539
    %v541 = vpack.c.bf16 %v540, %v540
    %v542 = vld [vmem:[#allocation11] sm:$0xf]
    %v543 = vld [vmem:[#allocation11 + $0x4] sm:$0xf]
    %v544 = vld [vmem:[#allocation11 + $0x8] sm:$0xf]
    %v545 = vld [vmem:[#allocation11 + $0xc] sm:$0xf]
    %v546 = vld [vmem:[#allocation11 + $0x10] sm:$0xf]
    %v547 = vld [vmem:[#allocation11 + $0x14] sm:$0xf]
    %v548 = vld [vmem:[#allocation11 + $0x18] sm:$0xf]
    %v549 = vld [vmem:[#allocation11 + $0x1c] sm:$0xf]
    %v550 = vld [vmem:[#allocation11 + $0x20] sm:$0xf]
    %v551 = vld [vmem:[#allocation11 + $0x24] sm:$0xf]
    %v552 = vld [vmem:[#allocation11 + $0x28] sm:$0xf]
    %v553 = vld [vmem:[#allocation11 + $0x2c] sm:$0xf]
    %v554 = vld [vmem:[#allocation11 + $0x30] sm:$0xf]
    %v555 = vld [vmem:[#allocation11 + $0x34] sm:$0xf]
    %v556 = vld [vmem:[#allocation11 + $0x38] sm:$0xf]
    %v557 = vld [vmem:[#allocation11 + $0x3c] sm:$0xf]
    %v558 = vld [vmem:[%s9] sm:$0x1]
    %v560 = vlaneseq
    %v561 = vshrl.u32 %v560, 7
    %v562 = vsub.s32 0, %v561
    %v563 = vrot.slane %v558, %v562
    %v581 = vunpack.c.l.b16 %v542
    %v582 = vunpack.c.l.b16 %v543
    %v583 = vunpack.c.l.b16 %v544
    %v584 = vunpack.c.l.b16 %v545
    %v585 = vunpack.c.l.b16 %v546
    %v586 = vunpack.c.l.b16 %v547
    %v587 = vunpack.c.l.b16 %v548
    %v588 = vunpack.c.l.b16 %v549
    %v589 = vunpack.c.l.b16 %v550
    %v590 = vunpack.c.l.b16 %v551
    %v591 = vunpack.c.l.b16 %v552
    %v592 = vunpack.c.l.b16 %v553
    %v593 = vunpack.c.l.b16 %v554
    %v594 = vunpack.c.l.b16 %v555
    %v595 = vunpack.c.l.b16 %v556
    %v596 = vunpack.c.l.b16 %v557
    %v597 = vpack.c.b16 %v582, %v581
    %v598 = vpack.c.b16 %v584, %v583
    %v599 = vpack.c.b16 %v586, %v585
    %v600 = vpack.c.b16 %v588, %v587
    %v601 = vpack.c.b16 %v590, %v589
    %v602 = vpack.c.b16 %v592, %v591
    %v603 = vpack.c.b16 %v594, %v593
    %v604 = vpack.c.b16 %v596, %v595
    %613 = vmatprep.subr.bf16.mxu0 0
    %614 = vmatpush1.bf16.msra.mxu0 %v597
    %615 = vmatprep.subr.bf16.mxu0 0
    %616 = vmatpush1.bf16.msra.mxu0 %v598
    %617 = vmatprep.subr.bf16.mxu0 0
    %618 = vmatpush1.bf16.msra.mxu0 %v599
    %619 = vmatprep.subr.bf16.mxu0 0
    %620 = vmatpush1.bf16.msra.mxu0 %v600
    %621 = vmatprep.subr.bf16.mxu0 0
    %622 = vmatpush1.bf16.msra.mxu0 %v601
    %623 = vmatprep.subr.bf16.mxu0 0
    %624 = vmatpush1.bf16.msra.mxu0 %v602
    %625 = vmatprep.subr.bf16.mxu0 0
    %626 = vmatpush1.bf16.msra.mxu0 %v603
    %627 = vmatprep.subr.bf16.mxu0 0
    %628 = vmatpush1.bf16.msra.mxu0 %v604
    %629 = vmatprep.subr.bf16.mxu0 0
    %630 = vmatpush1.bf16.msra.mxu0 0
    %631 = vmatprep.subr.bf16.mxu0 0
    %632 = vmatpush1.bf16.msra.mxu0 0
    %633 = vmatprep.subr.bf16.mxu0 0
    %634 = vmatpush1.bf16.msra.mxu0 0
    %635 = vmatprep.subr.bf16.mxu0 0
    %636 = vmatpush1.bf16.msra.mxu0 0
    %637 = vmatprep.subr.bf16.mxu0 0
    %638 = vmatpush1.bf16.msra.mxu0 0
    %639 = vmatprep.subr.bf16.mxu0 0
    %640 = vmatpush1.bf16.msra.mxu0 0
    %641 = vmatprep.subr.bf16.mxu0 0
    %642 = vmatpush1.bf16.msra.mxu0 0
    %643 = vmatprep.subr.bf16.mxu0 0
    %644 = vmatpush1.bf16.msra.mxu0 0
    %645 = vmatprep.mubr.bf16.mxu0 0
    %646 = vmatmul.mubr.bf16.gmra.mrb[0].mxu0 %v541
    %v647 = vpop.f32.mrb[0].mxu0
    %v648 = vadd.f32 %v563, %v647
    %v649 = vpop.f32.mrb[0].mxu0
    %v650 = vpop.f32.mrb[0].mxu0
    %v651 = vpop.f32.mrb[0].mxu0
    %652 = vdwg.mxu0
    %v653 = vmax.f32 %v648, 0.0
    %v654 = vpack.c.bf16 %v653, %v653
    %v655 = vld [vmem:[#allocation13] sm:$0xf]
    %v656 = vld [vmem:[#allocation13 + $0x4] sm:$0xf]
    %v657 = vld [vmem:[#allocation13 + $0x8] sm:$0xf]
    %v658 = vld [vmem:[#allocation13 + $0xc] sm:$0xf]
    %v659 = vld [vmem:[#allocation13 + $0x10] sm:$0xf]
    %v660 = vld [vmem:[#allocation13 + $0x14] sm:$0xf]
    %v661 = vld [vmem:[#allocation13 + $0x18] sm:$0xf]
    %v662 = vld [vmem:[#allocation13 + $0x1c] sm:$0xf]
    %v663 = vld [vmem:[#allocation13 + $0x20] sm:$0xf]
    %v664 = vld [vmem:[#allocation13 + $0x24] sm:$0xf]
    %v665 = vld [vmem:[#allocation13 + $0x28] sm:$0xf]
    %v666 = vld [vmem:[#allocation13 + $0x2c] sm:$0xf]
    %v667 = vld [vmem:[#allocation13 + $0x30] sm:$0xf]
    %v668 = vld [vmem:[#allocation13 + $0x34] sm:$0xf]
    %v669 = vld [vmem:[#allocation13 + $0x38] sm:$0xf]
    %v670 = vld [vmem:[#allocation13 + $0x3c] sm:$0xf]
    %v671 = vld [vmem:[%s11] sm:$0x1]
    %v673 = vlaneseq
    %v674 = vshrl.u32 %v673, 7
    %v675 = vsub.s32 0, %v674
    %v676 = vrot.slane %v671, %v675
    %v694 = vunpack.c.l.b16 %v655
    %v695 = vunpack.c.l.b16 %v656
    %v696 = vunpack.c.l.b16 %v657
    %v697 = vunpack.c.l.b16 %v658
    %v698 = vunpack.c.l.b16 %v659
    %v699 = vunpack.c.l.b16 %v660
    %v700 = vunpack.c.l.b16 %v661
    %v701 = vunpack.c.l.b16 %v662
    %v702 = vunpack.c.l.b16 %v663
    %v703 = vunpack.c.l.b16 %v664
    %v704 = vunpack.c.l.b16 %v665
    %v705 = vunpack.c.l.b16 %v666
    %v706 = vunpack.c.l.b16 %v667
    %v707 = vunpack.c.l.b16 %v668
    %v708 = vunpack.c.l.b16 %v669
    %v709 = vunpack.c.l.b16 %v670
    %v710 = vpack.c.b16 %v695, %v694
    %v711 = vpack.c.b16 %v697, %v696
    %v712 = vpack.c.b16 %v699, %v698
    %v713 = vpack.c.b16 %v701, %v700
    %v714 = vpack.c.b16 %v703, %v702
    %v715 = vpack.c.b16 %v705, %v704
    %v716 = vpack.c.b16 %v707, %v706
    %v717 = vpack.c.b16 %v709, %v708
    %726 = vmatprep.subr.bf16.mxu0 0
    %727 = vmatpush1.bf16.msra.mxu0 %v710
    %728 = vmatprep.subr.bf16.mxu0 0
    %729 = vmatpush1.bf16.msra.mxu0 %v711
    %730 = vmatprep.subr.bf16.mxu0 0
    %731 = vmatpush1.bf16.msra.mxu0 %v712
    %732 = vmatprep.subr.bf16.mxu0 0
    %733 = vmatpush1.bf16.msra.mxu0 %v713
    %734 = vmatprep.subr.bf16.mxu0 0
    %735 = vmatpush1.bf16.msra.mxu0 %v714
    %736 = vmatprep.subr.bf16.mxu0 0
    %737 = vmatpush1.bf16.msra.mxu0 %v715
    %738 = vmatprep.subr.bf16.mxu0 0
    %739 = vmatpush1.bf16.msra.mxu0 %v716
    %740 = vmatprep.subr.bf16.mxu0 0
    %741 = vmatpush1.bf16.msra.mxu0 %v717
    %742 = vmatprep.subr.bf16.mxu0 0
    %743 = vmatpush1.bf16.msra.mxu0 0
    %744 = vmatprep.subr.bf16.mxu0 0
    %745 = vmatpush1.bf16.msra.mxu0 0
    %746 = vmatprep.subr.bf16.mxu0 0
    %747 = vmatpush1.bf16.msra.mxu0 0
    %748 = vmatprep.subr.bf16.mxu0 0
    %749 = vmatpush1.bf16.msra.mxu0 0
    %750 = vmatprep.subr.bf16.mxu0 0
    %751 = vmatpush1.bf16.msra.mxu0 0
    %752 = vmatprep.subr.bf16.mxu0 0
    %753 = vmatpush1.bf16.msra.mxu0 0
    %754 = vmatprep.subr.bf16.mxu0 0
    %755 = vmatpush1.bf16.msra.mxu0 0
    %756 = vmatprep.subr.bf16.mxu0 0
    %757 = vmatpush1.bf16.msra.mxu0 0
    %758 = vmatprep.mubr.bf16.mxu0 0
    %759 = vmatmul.mubr.bf16.gmra.mrb[0].mxu0 %v654
    %v760 = vpop.f32.mrb[0].mxu0
    %v761 = vadd.f32 %v676, %v760
    %v762 = vpop.f32.mrb[0].mxu0
    %v763 = vpop.f32.mrb[0].mxu0
    %v764 = vpop.f32.mrb[0].mxu0
    %765 = vdwg.mxu0
    %v766 = vmax.f32 %v761, 0.0
    %v767 = vpack.c.bf16 %v766, %v766
    %v768 = vld [vmem:[#allocation14] sm:$0xf]
    %v769 = vld [vmem:[#allocation14 + $0x4] sm:$0xf]
    %v770 = vld [vmem:[#allocation14 + $0x8] sm:$0xf]
    %v771 = vld [vmem:[#allocation14 + $0xc] sm:$0xf]
    %v772 = vld [vmem:[#allocation14 + $0x10] sm:$0xf]
    %v773 = vld [vmem:[#allocation14 + $0x14] sm:$0xf]
    %v774 = vld [vmem:[#allocation14 + $0x18] sm:$0xf]
    %v775 = vld [vmem:[#allocation14 + $0x1c] sm:$0xf]
    %v776 = vld [vmem:[#allocation14 + $0x20] sm:$0xf]
    %v777 = vld [vmem:[#allocation14 + $0x24] sm:$0xf]
    %v778 = vld [vmem:[#allocation14 + $0x28] sm:$0xf]
    %v779 = vld [vmem:[#allocation14 + $0x2c] sm:$0xf]
    %v780 = vld [vmem:[#allocation14 + $0x30] sm:$0xf]
    %v781 = vld [vmem:[#allocation14 + $0x34] sm:$0xf]
    %v782 = vld [vmem:[#allocation14 + $0x38] sm:$0xf]
    %v783 = vld [vmem:[#allocation14 + $0x3c] sm:$0xf]
    %v784 = vld [vmem:[%s13] sm:$0x1]
    %v786 = vlaneseq
    %v787 = vshrl.u32 %v786, 7
    %v788 = vsub.s32 0, %v787
    %v789 = vrot.slane %v784, %v788
    %v807 = vunpack.c.l.b16 %v768
    %v808 = vunpack.c.l.b16 %v769
    %v809 = vunpack.c.l.b16 %v770
    %v810 = vunpack.c.l.b16 %v771
    %v811 = vunpack.c.l.b16 %v772
    %v812 = vunpack.c.l.b16 %v773
    %v813 = vunpack.c.l.b16 %v774
    %v814 = vunpack.c.l.b16 %v775
    %v815 = vunpack.c.l.b16 %v776
    %v816 = vunpack.c.l.b16 %v777
    %v817 = vunpack.c.l.b16 %v778
    %v818 = vunpack.c.l.b16 %v779
    %v819 = vunpack.c.l.b16 %v780
    %v820 = vunpack.c.l.b16 %v781
    %v821 = vunpack.c.l.b16 %v782
    %v822 = vunpack.c.l.b16 %v783
    %v823 = vpack.c.b16 %v808, %v807
    %v824 = vpack.c.b16 %v810, %v809
    %v825 = vpack.c.b16 %v812, %v811
    %v826 = vpack.c.b16 %v814, %v813
    %v827 = vpack.c.b16 %v816, %v815
    %v828 = vpack.c.b16 %v818, %v817
    %v829 = vpack.c.b16 %v820, %v819
    %v830 = vpack.c.b16 %v822, %v821
    %839 = vmatprep.subr.bf16.mxu0 0
    %840 = vmatpush1.bf16.msra.mxu0 %v823
    %841 = vmatprep.subr.bf16.mxu0 0
    %842 = vmatpush1.bf16.msra.mxu0 %v824
    %843 = vmatprep.subr.bf16.mxu0 0
    %844 = vmatpush1.bf16.msra.mxu0 %v825
    %845 = vmatprep.subr.bf16.mxu0 0
    %846 = vmatpush1.bf16.msra.mxu0 %v826
    %847 = vmatprep.subr.bf16.mxu0 0
    %848 = vmatpush1.bf16.msra.mxu0 %v827
    %849 = vmatprep.subr.bf16.mxu0 0
    %850 = vmatpush1.bf16.msra.mxu0 %v828
    %851 = vmatprep.subr.bf16.mxu0 0
    %852 = vmatpush1.bf16.msra.mxu0 %v829
    %853 = vmatprep.subr.bf16.mxu0 0
    %854 = vmatpush1.bf16.msra.mxu0 %v830
    %855 = vmatprep.subr.bf16.mxu0 0
    %856 = vmatpush1.bf16.msra.mxu0 0
    %857 = vmatprep.subr.bf16.mxu0 0
    %858 = vmatpush1.bf16.msra.mxu0 0
    %859 = vmatprep.subr.bf16.mxu0 0
    %860 = vmatpush1.bf16.msra.mxu0 0
    %861 = vmatprep.subr.bf16.mxu0 0
    %862 = vmatpush1.bf16.msra.mxu0 0
    %863 = vmatprep.subr.bf16.mxu0 0
    %864 = vmatpush1.bf16.msra.mxu0 0
    %865 = vmatprep.subr.bf16.mxu0 0
    %866 = vmatpush1.bf16.msra.mxu0 0
    %867 = vmatprep.subr.bf16.mxu0 0
    %868 = vmatpush1.bf16.msra.mxu0 0
    %869 = vmatprep.subr.bf16.mxu0 0
    %870 = vmatpush1.bf16.msra.mxu0 0
    %871 = vmatprep.mubr.bf16.mxu0 0
    %872 = vmatmul.mubr.bf16.gmra.mrb[0].mxu0 %v767
    %v873 = vpop.f32.mrb[0].mxu0
    %v874 = vadd.f32 %v789, %v873
    %v875 = vpop.f32.mrb[0].mxu0
    %v876 = vpop.f32.mrb[0].mxu0
    %v877 = vpop.f32.mrb[0].mxu0
    %878 = vdwg.mxu0
    %879 = vst [vmem:[#allocation16] sm:$0xff] %v874
    %880 = vst [vmem:[#allocation17] sm:$0xff] %v529
    %881 = vst [vmem:[#allocation19] sm:$0xff] %v531
    // Predicated region
    $region90: #{tpu_custom_call.1} parent=1 // pred_check
      _
    $region91: #{tpu_custom_call.1} parent=1 // pred_check_branch
      %883 = sbr.rel (0) target = $region93
    $region92: #{tpu_custom_call.1} parent=1 // pred_region
      %s885 = ssub.s32 128, 128
      %886 = vsyncadd [#allocation4], %s885
      %s888 = sshll.u32 [#allocation16], 4
      %s889 = int_to_ptr.vmem [resolvable:$true] %s888
      %891 = dma.vmem_to_hbm [thread:$0]  %s889, 128, %s14, [#allocation4]
    $region93: #{tpu_custom_call.1} parent=1 // pred_fallthru
      _
    // Predicated region
    $region94: #{tpu_custom_call.1} parent=1 // pred_check
      _
    $region95: #{tpu_custom_call.1} parent=1 // pred_check_branch
      %893 = sbr.rel (0) target = $region97
    $region96: #{tpu_custom_call.1} parent=1 // pred_region
      %s895 = ssub.s32 128, 128
      %896 = vsyncadd [#allocation18], %s895
      %s898 = sshll.u32 [#allocation17], 4
      %s899 = int_to_ptr.vmem [resolvable:$true] %s898
      %901 = dma.vmem_to_hbm [thread:$0]  %s899, 128, %s15, [#allocation18]
    $region97: #{tpu_custom_call.1} parent=1 // pred_fallthru
      _
    // Predicated region
    $region98: #{tpu_custom_call.1} parent=1 // pred_check
      _
    $region99: #{tpu_custom_call.1} parent=1 // pred_check_branch
      %903 = sbr.rel (0) target = $region101
    $region100: #{tpu_custom_call.1} parent=1 // pred_region
      %s905 = ssub.s32 128, 128
      %906 = vsyncadd [#allocation18], %s905
      %s908 = sshll.u32 [#allocation19], 4
      %s909 = int_to_ptr.vmem [resolvable:$true] %s908
      %911 = dma.vmem_to_hbm [thread:$0]  %s909, 128, %s16, [#allocation18]
    $region101: #{tpu_custom_call.1} parent=1 // pred_fallthru
      _
    // Predicated region
    $region102: #{tpu_custom_call.1} parent=1 // pred_check
      _
    $region103: #{tpu_custom_call.1} parent=1 // pred_check_branch
      %913 = sbr.rel (0) target = $region105
    $region104: #{tpu_custom_call.1} parent=1 // pred_region
      %914 = dma.done [#allocation4], 128
    $region105: #{tpu_custom_call.1} parent=1 // pred_fallthru
      _
    // Predicated region
    $region106: #{tpu_custom_call.1} parent=1 // pred_check
      _
    $region107: #{tpu_custom_call.1} parent=1 // pred_check_branch
      %916 = sbr.rel (0) target = $region109
    $region108: #{tpu_custom_call.1} parent=1 // pred_region
      %917 = dma.done [#allocation18], 128
    $region109: #{tpu_custom_call.1} parent=1 // pred_fallthru
      _
    // Predicated region
    $region110: #{tpu_custom_call.1} parent=1 // pred_check
      _
    $region111: #{tpu_custom_call.1} parent=1 // pred_check_branch
      %919 = sbr.rel (0) target = $region113
    $region112: #{tpu_custom_call.1} parent=1 // pred_region
      %920 = dma.done [#allocation18], 128
    $region113: #{tpu_custom_call.1} parent=1 // pred_fallthru
      _
    %921 = vsyncpa [#allocation3], 1
    %922 = vsyncpa [#allocation6], 1
    %923 = vsyncpa [#allocation9], 1
    %924 = vsyncpa [#allocation12], 1
    %925 = vsyncpa [#allocation15], 1
    %926 = vsyncpa [#allocation4], 1
    %927 = vsyncpa [#allocation18], 1

</llo_original>
